<compile_context>
chip_gen: v5e
topology: v5e:2x2
jax: 0.10.0
libtpu: 0.0.40
codegen_flags: <defaults>
</compile_context>

<pallas_src>
import jax
import jax.numpy as jnp
from jax.experimental import pallas as pl
from jax.experimental.pallas import tpu as pltpu


# ----------------------------------------------------------------------------
# Kernel: operates on the transposed activations (features on sublanes,
# batch on lanes).
# ----------------------------------------------------------------------------
def bnnet_kernel(xt_ref, w1_ref, b1_ref, w2_ref, b2_ref, w3_ref, b3_ref, ot_ref):
    xt = xt_ref[...]                                                  # [D_in, TB]

    # Layer 1: W1 [H, D_in] @ X^T [D_in, TB]  (f32 MXU accumulation)
    h1 = jnp.dot(w1_ref[...], xt, preferred_element_type=jnp.float32)
    h1 = jnp.maximum(h1 + b1_ref[...], 0.0)                           # [H, TB] f32

    # Layer 2: W2 [H, H] @ H1 [H, TB]
    h2 = jnp.dot(w2_ref[...], h1.astype(w2_ref.dtype),
                 preferred_element_type=jnp.float32)
    h2 = jnp.maximum(h2 + b2_ref[...], 0.0)                           # [H, TB] f32

    # Layer 3: W3 [D_out, H] @ H2 [H, TB]
    y = jnp.dot(w3_ref[...], h2.astype(w3_ref.dtype),
                preferred_element_type=jnp.float32) + b3_ref[...]     # [D_out, TB]

    # ClampSTE forward: clamp to [-1, 1].  TILE_B is a multiple of 128, so this
    # store is lane-dense (unmasked vst).
    ot_ref[...] = jnp.clip(y, -1.0, 1.0).astype(ot_ref.dtype)


# ----------------------------------------------------------------------------
# Tiling / VMEM sizing helpers
# ----------------------------------------------------------------------------
def _round_up(x, m):
    return ((x + m - 1) // m) * m


def _vmem_bytes(tile_b, d_in, h, d_out, io_bytes, out_bytes):
    """VMEM footprint estimate, including (8,128) layout padding and 2x
    pipeline buffers for every BlockSpec-managed input/output."""
    sub = lambda n: _round_up(n, 8)      # sublane padding
    lane = lambda n: _round_up(n, 128)   # lane padding

    # Streamed, double-buffered activation blocks (x^T in, y^T out).
    stream = 2 * sub(d_in) * tile_b * io_bytes
    stream += 2 * sub(d_out) * tile_b * out_bytes
    # Constant-index weights & biases (still double-buffered by the pipeline).
    weights = 2 * (sub(h) * lane(d_in) + sub(h) * lane(h)
                   + sub(d_out) * lane(h)) * io_bytes
    biases = 2 * (2 * sub(h) + sub(d_out)) * lane(1) * 4
    # f32 h1/h2 intermediates live simultaneously inside the body.
    inter = 2 * sub(h) * tile_b * 4
    return stream + weights + biases + inter


def _pick_tile_b(batch, d_in, h, d_out, io_bytes, out_bytes,
                 max_tile=8192, min_steps=4, budget_bytes=12 << 20):
    """Pick a lane-aligned batch tile with minimal padding.

    - tile is a multiple of 128 (batch lives on the lane axis),
    - at least `min_steps` grid steps when the batch is large enough
      (keeps both v7x TensorCores busy via the 'parallel' grid axis),
    - capped at `max_tile` rows and shrunk until the VMEM estimate fits a
      budget that is safe under v5e's 16 MiB scoped default (we also raise the
      scoped limit explicitly in the wrapper).
    """
    lane = 128
    b_lane = _round_up(batch, lane)
    n_tiles = max(pl.cdiv(b_lane, max_tile), 1)
    if b_lane // lane >= min_steps:
        n_tiles = max(n_tiles, min_steps)
    tile = _round_up(pl.cdiv(b_lane, n_tiles), lane)
    while tile > lane and _vmem_bytes(tile, d_in, h, d_out,
                                      io_bytes, out_bytes) > budget_bytes:
        tile -= lane
    return tile


# ----------------------------------------------------------------------------
# Wrapper
# ----------------------------------------------------------------------------
def bnnet_forward(x, params, *, compute_dtype=jnp.bfloat16, tile_b=None):
    """x: [B, D_in]; params in PyTorch layout (w: [out, in], b: [out]).

    Returns [B, D_out] in compute_dtype (bf16 by default; output is clamped to
    [-1, 1] so bf16 precision is sufficient — pass compute_dtype=jnp.float32
    for exact f32 semantics).
    """
    w1, b1, w2, b2, w3, b3 = params
    B, D_in = x.shape
    H = w1.shape[0]
    D_out = w3.shape[0]

    io_bytes = jnp.dtype(compute_dtype).itemsize
    out_dtype = compute_dtype
    out_bytes = jnp.dtype(out_dtype).itemsize

    if tile_b is None:
        tile_b = _pick_tile_b(B, D_in, H, D_out, io_bytes, out_bytes)
    else:
        tile_b = max(128, _round_up(int(tile_b), 128))
    B_pad = _round_up(B, tile_b)
    grid = (B_pad // tile_b,)

    # Transpose at the wrapper boundary: batch onto the lane axis.
    x_t = x.astype(compute_dtype).T                                    # [D_in, B]
    if B_pad != B:
        x_t = jnp.pad(x_t, ((0, 0), (0, B_pad - B)))

    # Weights stay in PyTorch [out, in] layout; biases become [out, 1] columns
    # added post-accumulation in f32.
    w1c, w2c, w3c = (w.astype(compute_dtype) for w in (w1, w2, w3))
    b1c = b1.reshape(H, 1).astype(jnp.float32)
    b2c = b2.reshape(H, 1).astype(jnp.float32)
    b3c = b3.reshape(D_out, 1).astype(jnp.float32)

    cost = pl.CostEstimate(
        flops=2 * B_pad * (D_in * H + H * H + H * D_out),
        transcendentals=0,
        bytes_accessed=(
            B_pad * D_in * io_bytes
            + (D_in * H + H * H + H * D_out) * io_bytes
            + (H + H + D_out) * 4
            + B_pad * D_out * out_bytes
        ),
    )

    vmem_limit = int(min(max(2 * _vmem_bytes(tile_b, D_in, H, D_out,
                                             io_bytes, out_bytes),
                             16 << 20),
                         32 << 20))

    out_t = pl.pallas_call(
        bnnet_kernel,
        out_shape=jax.ShapeDtypeStruct((D_out, B_pad), out_dtype),
        grid=grid,
        in_specs=[
            # Streamed / pipelined x^T tiles (batch on lanes).
            pl.BlockSpec((D_in, tile_b), lambda i: (0, i)),
            # VMEM-resident weights & biases (constant block index).
            pl.BlockSpec((H, D_in), lambda i: (0, 0)),
            pl.BlockSpec((H, 1), lambda i: (0, 0)),
            pl.BlockSpec((H, H), lambda i: (0, 0)),
            pl.BlockSpec((H, 1), lambda i: (0, 0)),
            pl.BlockSpec((D_out, H), lambda i: (0, 0)),
            pl.BlockSpec((D_out, 1), lambda i: (0, 0)),
        ],
        out_specs=pl.BlockSpec((D_out, tile_b), lambda i: (0, i)),
        compiler_params=pltpu.CompilerParams(
            dimension_semantics=("parallel",),      # megacore sharding on v7x
            vmem_limit_bytes=vmem_limit,            # safe on v5e/v6e/v7x
        ),
        cost_estimate=cost,
    )(x_t, w1c, b1c, w2c, b2c, w3c, b3c)

    return out_t[:, :B].T                                              # [B, D_out]


# ----------------------------------------------------------------------------
# Params (PyTorch nn.Linear layout & init) / pure-JAX reference
# ----------------------------------------------------------------------------
def init_params(key, input_size, hl_size, output_size):
    ks = jax.random.split(key, 6)

    def linear(kw, kb, fan_in, fan_out):
        bound = 1.0 / jnp.sqrt(fan_in)
        w = jax.random.uniform(kw, (fan_out, fan_in), jnp.float32, -bound, bound)
        b = jax.random.uniform(kb, (fan_out,), jnp.float32, -bound, bound)
        return w, b

    w1, b1 = linear(ks[0], ks[1], input_size, hl_size)
    w2, b2 = linear(ks[2], ks[3], hl_size, hl_size)
    w3, b3 = linear(ks[4], ks[5], hl_size, output_size)
    return (w1, b1, w2, b2, w3, b3)


def reference_forward(x, params):
    w1, b1, w2, b2, w3, b3 = params
    h1 = jnp.maximum(x @ w1.T + b1, 0.0)
    h2 = jnp.maximum(h1 @ w2.T + b2, 0.0)
    return jnp.clip(h2 @ w3.T + b3, -1.0, 1.0)


# ----------------------------------------------------------------------------
# Demo / self-check
# ----------------------------------------------------------------------------
if __name__ == "__main__":
    # Shapes consistent with BNNet(input_size=4, output_size=4, hl_size=32).
    B, D_in, H, D_out = 8, 4, 32, 4
    key = jax.random.PRNGKey(0)
    kx, kp, kx2 = jax.random.split(key, 3)
    x = jax.random.normal(kx, (B, D_in), jnp.float32)
    params = init_params(kp, D_in, H, D_out)
    ref = reference_forward(x, params)

    # Default path: bf16 compute + bf16 output (looser tolerance).
    out_bf16 = jax.block_until_ready(bnnet_forward(x, params))
    assert out_bf16.shape == (B, D_out)
    assert jnp.allclose(out_bf16.astype(jnp.float32), ref, atol=3e-2, rtol=3e-2)

    # Pure f32 path: exact semantics check against the reference.
    out_f32 = jax.block_until_ready(
        bnnet_forward(x, params, compute_dtype=jnp.float32))
    assert jnp.allclose(out_f32, ref, atol=1e-5, rtol=1e-5)

    # Uneven batch (exercises lane padding + batch-tile handling).
    x2 = jax.random.normal(kx2, (13, D_in), jnp.float32)
    out2 = jax.block_until_ready(
        bnnet_forward(x2, params, compute_dtype=jnp.float32))
    assert out2.shape == (13, D_out)
    assert jnp.allclose(out2, reference_forward(x2, params), atol=1e-5, rtol=1e-5)

    # Larger, non-multiple batch in bf16 (multiple grid steps, megacore path).
    x3 = jax.random.normal(kx, (1037, D_in), jnp.float32)
    out3 = jax.block_until_ready(bnnet_forward(x3, params))
    assert out3.shape == (1037, D_out)
    assert jnp.allclose(out3.astype(jnp.float32), reference_forward(x3, params),
                        atol=3e-2, rtol=3e-2)

    print("KERNEL_OK")
</pallas_src>

<mosaic_0001>
module attributes {stable_mosaic.version = 11 : i64} {
  func.func @bnnet_kernel(%arg0: i32, %arg1: memref<4x128xbf16, #tpu.memory_space<vmem>>, %arg2: memref<32x4xbf16, #tpu.memory_space<vmem>>, %arg3: memref<32x1xf32, #tpu.memory_space<vmem>>, %arg4: memref<32x32xbf16, #tpu.memory_space<vmem>>, %arg5: memref<32x1xf32, #tpu.memory_space<vmem>>, %arg6: memref<4x32xbf16, #tpu.memory_space<vmem>>, %arg7: memref<4x1xf32, #tpu.memory_space<vmem>>, %arg8: memref<4x128xbf16, #tpu.memory_space<vmem>>) attributes {dimension_semantics = [#tpu.dimension_semantics<parallel>], iteration_bounds = array<i64: 1>, scalar_prefetch = 0 : i64, scratch_operands = 0 : i64, tpu.core_type = #tpu.core_type<tc>, window_params = [{transform_indices = @transform_0, window_bounds = array<i64: 4, 128>}, {pipeline_mode = #tpu.pipeline_mode<synchronous>, transform_indices = @transform_1, window_bounds = array<i64: 32, 4>}, {pipeline_mode = #tpu.pipeline_mode<synchronous>, transform_indices = @transform_2, window_bounds = array<i64: 32, 1>}, {pipeline_mode = #tpu.pipeline_mode<synchronous>, transform_indices = @transform_3, window_bounds = array<i64: 32, 32>}, {pipeline_mode = #tpu.pipeline_mode<synchronous>, transform_indices = @transform_4, window_bounds = array<i64: 32, 1>}, {pipeline_mode = #tpu.pipeline_mode<synchronous>, transform_indices = @transform_5, window_bounds = array<i64: 4, 32>}, {pipeline_mode = #tpu.pipeline_mode<synchronous>, transform_indices = @transform_6, window_bounds = array<i64: 4, 1>}, {transform_indices = @transform_7, window_bounds = array<i64: 4, 128>}]} {
    %c0 = arith.constant 0 : index
    %c0_0 = arith.constant 0 : index
    %0 = vector.load %arg1[%c0, %c0_0] : memref<4x128xbf16, #tpu.memory_space<vmem>>, vector<4x128xbf16>
    %c0_1 = arith.constant 0 : index
    %c0_2 = arith.constant 0 : index
    %1 = vector.load %arg2[%c0_1, %c0_2] : memref<32x4xbf16, #tpu.memory_space<vmem>>, vector<32x4xbf16>
    %cst = arith.constant dense<0.000000e+00> : vector<32x128xf32>
    %2 = tpu.matmul %1, %0, %cst {dimension_numbers = #tpu.dot_dimension_numbers<[1], [0], [0], [1], [0, 0, 1, 1], [], []>} : vector<32x4xbf16>, vector<4x128xbf16>, vector<32x128xf32> -> vector<32x128xf32>
    %c0_3 = arith.constant 0 : index
    %c0_4 = arith.constant 0 : index
    %3 = vector.load %arg3[%c0_3, %c0_4] : memref<32x1xf32, #tpu.memory_space<vmem>>, vector<32x1xf32>
    %4 = vector.broadcast %3 : vector<32x1xf32> to vector<32x128xf32>
    %5 = arith.addf %2, %4 : vector<32x128xf32>
    %cst_5 = arith.constant 0.000000e+00 : f32
    %6 = vector.broadcast %cst_5 : f32 to vector<32x128xf32>
    %7 = arith.maximumf %5, %6 : vector<32x128xf32>
    %c0_6 = arith.constant 0 : index
    %c0_7 = arith.constant 0 : index
    %8 = vector.load %arg4[%c0_6, %c0_7] : memref<32x32xbf16, #tpu.memory_space<vmem>>, vector<32x32xbf16>
    %9 = arith.truncf %7 : vector<32x128xf32> to vector<32x128xbf16>
    %cst_8 = arith.constant dense<0.000000e+00> : vector<32x128xf32>
    %10 = tpu.matmul %8, %9, %cst_8 {dimension_numbers = #tpu.dot_dimension_numbers<[1], [0], [0], [1], [0, 0, 1, 1], [], []>} : vector<32x32xbf16>, vector<32x128xbf16>, vector<32x128xf32> -> vector<32x128xf32>
    %c0_9 = arith.constant 0 : index
    %c0_10 = arith.constant 0 : index
    %11 = vector.load %arg5[%c0_9, %c0_10] : memref<32x1xf32, #tpu.memory_space<vmem>>, vector<32x1xf32>
    %12 = vector.broadcast %11 : vector<32x1xf32> to vector<32x128xf32>
    %13 = arith.addf %10, %12 : vector<32x128xf32>
    %cst_11 = arith.constant 0.000000e+00 : f32
    %14 = vector.broadcast %cst_11 : f32 to vector<32x128xf32>
    %15 = arith.maximumf %13, %14 : vector<32x128xf32>
    %c0_12 = arith.constant 0 : index
    %c0_13 = arith.constant 0 : index
    %16 = vector.load %arg6[%c0_12, %c0_13] : memref<4x32xbf16, #tpu.memory_space<vmem>>, vector<4x32xbf16>
    %17 = arith.truncf %15 : vector<32x128xf32> to vector<32x128xbf16>
    %cst_14 = arith.constant dense<0.000000e+00> : vector<4x128xf32>
    %18 = tpu.matmul %16, %17, %cst_14 {dimension_numbers = #tpu.dot_dimension_numbers<[1], [0], [0], [1], [0, 0, 1, 1], [], []>} : vector<4x32xbf16>, vector<32x128xbf16>, vector<4x128xf32> -> vector<4x128xf32>
    %c0_15 = arith.constant 0 : index
    %c0_16 = arith.constant 0 : index
    %19 = vector.load %arg7[%c0_15, %c0_16] : memref<4x1xf32, #tpu.memory_space<vmem>>, vector<4x1xf32>
    %20 = vector.broadcast %19 : vector<4x1xf32> to vector<4x128xf32>
    %21 = arith.addf %18, %20 : vector<4x128xf32>
    %cst_17 = arith.constant -1.000000e+00 : f32
    %cst_18 = arith.constant 1.000000e+00 : f32
    %22 = vector.broadcast %cst_17 : f32 to vector<4x128xf32>
    %23 = arith.maximumf %22, %21 : vector<4x128xf32>
    %24 = vector.broadcast %cst_18 : f32 to vector<4x128xf32>
    %25 = arith.minimumf %24, %23 : vector<4x128xf32>
    %26 = arith.truncf %25 : vector<4x128xf32> to vector<4x128xbf16>
    %c0_19 = arith.constant 0 : index
    %c0_20 = arith.constant 0 : index
    %27 = vector.load %arg8[%c0_19, %c0_20] : memref<4x128xbf16, #tpu.memory_space<vmem>>, vector<4x128xbf16>
    tpu.vector_store %arg8[%c0_19, %c0_20], %26 {strides = array<i32>} : memref<4x128xbf16, #tpu.memory_space<vmem>>, vector<4x128xbf16>,
    return
  }
  func.func @transform_0(%arg0: i32) -> (i32, i32) {
    %c0_i32 = arith.constant 0 : i32
    %c0_i32_0 = arith.constant 0 : i32
    return %c0_i32, %arg0 : i32, i32
  }
  func.func @transform_1(%arg0: i32) -> (i32, i32) {
    %c0_i32 = arith.constant 0 : i32
    %c0_i32_0 = arith.constant 0 : i32
    %c0_i32_1 = arith.constant 0 : i32
    return %c0_i32, %c0_i32_0 : i32, i32
  }
  func.func @transform_2(%arg0: i32) -> (i32, i32) {
    %c0_i32 = arith.constant 0 : i32
    %c0_i32_0 = arith.constant 0 : i32
    %c0_i32_1 = arith.constant 0 : i32
    return %c0_i32, %c0_i32_0 : i32, i32
  }
  func.func @transform_3(%arg0: i32) -> (i32, i32) {
    %c0_i32 = arith.constant 0 : i32
    %c0_i32_0 = arith.constant 0 : i32
    %c0_i32_1 = arith.constant 0 : i32
    return %c0_i32, %c0_i32_0 : i32, i32
  }
  func.func @transform_4(%arg0: i32) -> (i32, i32) {
    %c0_i32 = arith.constant 0 : i32
    %c0_i32_0 = arith.constant 0 : i32
    %c0_i32_1 = arith.constant 0 : i32
    return %c0_i32, %c0_i32_0 : i32, i32
  }
  func.func @transform_5(%arg0: i32) -> (i32, i32) {
    %c0_i32 = arith.constant 0 : i32
    %c0_i32_0 = arith.constant 0 : i32
    %c0_i32_1 = arith.constant 0 : i32
    return %c0_i32, %c0_i32_0 : i32, i32
  }
  func.func @transform_6(%arg0: i32) -> (i32, i32) {
    %c0_i32 = arith.constant 0 : i32
    %c0_i32_0 = arith.constant 0 : i32
    %c0_i32_1 = arith.constant 0 : i32
    return %c0_i32, %c0_i32_0 : i32, i32
  }
  func.func @transform_7(%arg0: i32) -> (i32, i32) {
    %c0_i32 = arith.constant 0 : i32
    %c0_i32_0 = arith.constant 0 : i32
    return %c0_i32, %arg0 : i32, i32
  }
}

</mosaic_0001>

<llo_original>
// kernel: tpu_custom_call.1
$region0: #{tpu_custom_call.1}
  #allocation0 [shape = 'u32[]', space=smem, size = 0x4, offset = 0x4, fixed_abs, tag = 'smem constant byte address 0x4 - core index']
  #allocation1 [shape = 'u32[72,128]{1,0:T(1,128)}', space=vmem, size = 0x9000, scoped, tag = 'internal scratch']
  %s0 = inlined_call_operand.vmem [shape: bf16[4,128], index: 0, kind: input, shape index: {}]
  %s1 = inlined_call_operand.vmem [shape: bf16[32,4], index: 1, kind: input, shape index: {}]
  %s2 = inlined_call_operand.vmem [shape: f32[32,1], index: 2, kind: input, shape index: {}]
  %s3 = inlined_call_operand.vmem [shape: bf16[32,32], index: 3, kind: input, shape index: {}]
  %s4 = inlined_call_operand.vmem [shape: f32[32,1], index: 4, kind: input, shape index: {}]
  %s5 = inlined_call_operand.vmem [shape: bf16[4,32], index: 5, kind: input, shape index: {}]
  %s6 = inlined_call_operand.vmem [shape: f32[4,1], index: 6, kind: input, shape index: {}]
  %s7 = inlined_call_operand.hbm [shape: bf16[4,128], index: 7, kind: output, shape index: {}]
  %s8 = sld [smem:[#allocation0]]
  $region38: #{tpu_custom_call.1} parent=0
    _
  %s10 = ssub.s32 1, %s8
  %s11 = scalar_select 0, %s10, %s8
  $region1: #{tpu_custom_call.1} parent=0
    #allocation2 [shape = 'u8[1024]{0}', space=vmem, size = 0x400, scoped, tag = 'output window, operand 0, single buffered']
    #allocation3 [shape = 's32[1]{0}', space=sflag, size = 0x4, scoped, tag = 'scoped memory for tpu_custom_call.1']
    %12 = vsyncpa [#allocation3], 0
    // Predicated region
    $region2: #{tpu_custom_call.1} parent=1 // pred_check
      _
    $region3: #{tpu_custom_call.1} parent=1 // pred_check_branch
      %14 = sbr.rel (0) target = $region5
    $region4: #{tpu_custom_call.1} parent=1 // pred_region
      _
    $region5: #{tpu_custom_call.1} parent=1 // pred_fallthru
      _
    // Predicated region
    $region6: #{tpu_custom_call.1} parent=1 // pred_check
      _
    $region7: #{tpu_custom_call.1} parent=1 // pred_check_branch
      %16 = sbr.rel (0) target = $region9
    $region8: #{tpu_custom_call.1} parent=1 // pred_region
      _
    $region9: #{tpu_custom_call.1} parent=1 // pred_fallthru
      _
    // Predicated region
    $region10: #{tpu_custom_call.1} parent=1 // pred_check
      _
    $region11: #{tpu_custom_call.1} parent=1 // pred_check_branch
      %18 = sbr.rel (0) target = $region13
    $region12: #{tpu_custom_call.1} parent=1 // pred_region
      _
    $region13: #{tpu_custom_call.1} parent=1 // pred_fallthru
      _
    // Predicated region
    $region14: #{tpu_custom_call.1} parent=1 // pred_check
      _
    $region15: #{tpu_custom_call.1} parent=1 // pred_check_branch
      %20 = sbr.rel (0) target = $region17
    $region16: #{tpu_custom_call.1} parent=1 // pred_region
      _
    $region17: #{tpu_custom_call.1} parent=1 // pred_fallthru
      _
    // Predicated region
    $region18: #{tpu_custom_call.1} parent=1 // pred_check
      _
    $region19: #{tpu_custom_call.1} parent=1 // pred_check_branch
      %22 = sbr.rel (0) target = $region21
    $region20: #{tpu_custom_call.1} parent=1 // pred_region
      _
    $region21: #{tpu_custom_call.1} parent=1 // pred_fallthru
      _
    // Predicated region
    $region22: #{tpu_custom_call.1} parent=1 // pred_check
      _
    $region23: #{tpu_custom_call.1} parent=1 // pred_check_branch
      %24 = sbr.rel (0) target = $region25
    $region24: #{tpu_custom_call.1} parent=1 // pred_region
      _
    $region25: #{tpu_custom_call.1} parent=1 // pred_fallthru
      _
    // Predicated region
    $region26: #{tpu_custom_call.1} parent=1 // pred_check
      _
    $region27: #{tpu_custom_call.1} parent=1 // pred_check_branch
      %26 = sbr.rel (0) target = $region29
    $region28: #{tpu_custom_call.1} parent=1 // pred_region
      _
    $region29: #{tpu_custom_call.1} parent=1 // pred_fallthru
      _
    %v28 = vld [vmem:[%s0] sm:$0x3]
    %v29 = vld [vmem:[%s1] sm:$0xf]
    %v30 = vld [vmem:[%s1 + $0x4] sm:$0xf]
    %v31 = vld [vmem:[%s1 + $0x8] sm:$0xf]
    %v32 = vld [vmem:[%s1 + $0xc] sm:$0xf]
    %v33 = vld [vmem:[%s2] sm:$0xff]
    %v34 = vld [vmem:[%s2 + $0x8] sm:$0xff]
    %v35 = vld [vmem:[%s2 + $0x10] sm:$0xff]
    %v36 = vld [vmem:[%s2 + $0x18] sm:$0xff]
    %38 = vset.pattern.permute.xlu0 0
    %39 = vperm.xlu0 %38, %v33
    %v40 = vpop.permute.xlu0 %39
    %43 = vset.pattern.permute.xlu0 0
    %44 = vperm.xlu0 %43, %v34
    %v45 = vpop.permute.xlu0 %44
    %48 = vset.pattern.permute.xlu0 0
    %49 = vperm.xlu0 %48, %v35
    %v50 = vpop.permute.xlu0 %49
    %53 = vset.pattern.permute.xlu0 0
    %54 = vperm.xlu0 %53, %v36
    %v55 = vpop.permute.xlu0 %54
    %v61 = vunpack.c.l.b16 %v29
    %v62 = vunpack.c.l.b16 %v30
    %v63 = vunpack.c.l.b16 %v31
    %v64 = vunpack.c.l.b16 %v32
    %v65 = vpack.c.b16 %v62, %v61
    %v66 = vpack.c.b16 %v64, %v63
    %vm67 = vcmask 31744
    %v69 = vsel %vm67, %v65, 0
    %v72 = vsel %vm67, %v66, 0
    %vm74 = vcmask 1041408
    %v76 = vsel %vm74, %v28, 0
    %78 = vmatpush.bf16.msra.mxu0 0
    %79 = vmatpush.bf16.msra.mxu0 0
    %80 = vmatpush.bf16.msra.mxu0 0
    %81 = vmatpush.bf16.msra.mxu0 0
    %82 = vmatpush.bf16.msra.mxu0 0
    %83 = vmatpush.bf16.msra.mxu0 0
    %84 = vmatpush.bf16.msra.mxu0 0
    %85 = vmatpush.bf16.msra.mxu0 %v76
    %86 = vmatmul.bf16.gmra.mxu0 %v69
    %v87 = vpop.f32.mrf.mxu0
    %v88 = vadd.f32 %v40, %v87
    %v89 = vpop.f32.mrf.mxu0
    %v90 = vadd.f32 %v45, %v89
    %91 = vmatmul.bf16.gmra.mxu0 %v72
    %v92 = vpop.f32.mrf.mxu0
    %v93 = vadd.f32 %v50, %v92
    %v94 = vpop.f32.mrf.mxu0
    %v95 = vadd.f32 %v55, %v94
    %96 = vdwg.mxu0
    %v97 = vmax.f32 %v88, 0.0
    %v98 = vmax.f32 %v90, 0.0
    %v99 = vmax.f32 %v93, 0.0
    %v100 = vmax.f32 %v95, 0.0
    %v101 = vld [vmem:[%s3] sm:$0xf]
    %v102 = vld [vmem:[%s3 + $0x4] sm:$0xf]
    %v103 = vld [vmem:[%s3 + $0x8] sm:$0xf]
    %v104 = vld [vmem:[%s3 + $0xc] sm:$0xf]
    %v105 = vpack.c.bf16 %v98, %v97
    %v106 = vpack.c.bf16 %v100, %v99
    %v107 = vld [vmem:[%s4] sm:$0xff]
    %v108 = vld [vmem:[%s4 + $0x8] sm:$0xff]
    %v109 = vld [vmem:[%s4 + $0x10] sm:$0xff]
    %v110 = vld [vmem:[%s4 + $0x18] sm:$0xff]
    %112 = vset.pattern.permute.xlu0 0
    %113 = vperm.xlu0 %112, %v107
    %v114 = vpop.permute.xlu0 %113
    %117 = vset.pattern.permute.xlu0 0
    %118 = vperm.xlu0 %117, %v108
    %v119 = vpop.permute.xlu0 %118
    %122 = vset.pattern.permute.xlu0 0
    %123 = vperm.xlu0 %122, %v109
    %v124 = vpop.permute.xlu0 %123
    %127 = vset.pattern.permute.xlu0 0
    %128 = vperm.xlu0 %127, %v110
    %v129 = vpop.permute.xlu0 %128
    %v135 = vunpack.c.l.b16 %v101
    %v136 = vunpack.c.l.b16 %v102
    %v137 = vunpack.c.l.b16 %v103
    %v138 = vunpack.c.l.b16 %v104
    %v139 = vpack.c.b16 %v136, %v135
    %v140 = vpack.c.b16 %v138, %v137
    %vm141 = vcmask 261120
    %v143 = vsel %vm141, %v139, 0
    %v146 = vsel %vm141, %v140, 0
    %148 = vmatpush.bf16.msra.mxu0 0
    %149 = vmatpush.bf16.msra.mxu0 0
    %150 = vmatpush.bf16.msra.mxu0 0
    %151 = vmatpush.bf16.msra.mxu0 0
    %152 = vmatpush.bf16.msra.mxu0 0
    %153 = vmatpush.bf16.msra.mxu0 0
    %154 = vmatpush.bf16.msra.mxu0 %v106
    %155 = vmatpush.bf16.msra.mxu0 %v105
    %156 = vmatmul.bf16.gmra.mxu0 %v143
    %v157 = vpop.f32.mrf.mxu0
    %v158 = vadd.f32 %v114, %v157
    %v159 = vpop.f32.mrf.mxu0
    %v160 = vadd.f32 %v119, %v159
    %161 = vmatmul.bf16.gmra.mxu0 %v146
    %v162 = vpop.f32.mrf.mxu0
    %v163 = vadd.f32 %v124, %v162
    %v164 = vpop.f32.mrf.mxu0
    %v165 = vadd.f32 %v129, %v164
    %166 = vdwg.mxu0
    %v167 = vmax.f32 %v158, 0.0
    %v168 = vmax.f32 %v160, 0.0
    %v169 = vmax.f32 %v163, 0.0
    %v170 = vmax.f32 %v165, 0.0
    %v171 = vld [vmem:[%s5] sm:$0x3]
    %v172 = vpack.c.bf16 %v168, %v167
    %v173 = vpack.c.bf16 %v170, %v169
    %v174 = vld [vmem:[%s6] sm:$0xf]
    %176 = vset.pattern.permute.xlu0 0
    %177 = vperm.xlu0 %176, %v174
    %v178 = vpop.permute.xlu0 %177
    %v181 = vsel %vm141, %v171, 0
    %183 = vmatpush.bf16.msra.mxu0 0
    %184 = vmatpush.bf16.msra.mxu0 0
    %185 = vmatpush.bf16.msra.mxu0 0
    %186 = vmatpush.bf16.msra.mxu0 0
    %187 = vmatpush.bf16.msra.mxu0 0
    %188 = vmatpush.bf16.msra.mxu0 0
    %189 = vmatpush.bf16.msra.mxu0 %v173
    %190 = vmatpush.bf16.msra.mxu0 %v172
    %191 = vmatmul.bf16.gmra.mxu0 %v181
    %v192 = vpop.f32.mrf.mxu0
    %v193 = vadd.f32 %v178, %v192
    %v194 = vpop.f32.mrf.mxu0
    %195 = vdwg.mxu0
    %v196 = vmax.f32 %v193, -1.0
    %v197 = vmin.f32 %v196, 1.0
    %v198 = vpack.c.bf16 %v197, %v197
    %199 = vst [vmem:[#allocation2] sm:$0x3] %v198
    // Predicated region
    $region30: #{tpu_custom_call.1} parent=1 // pred_check
      _
    $region31: #{tpu_custom_call.1} parent=1 // pred_check_branch
      %201 = sbr.rel (0) target = $region33
    $region32: #{tpu_custom_call.1} parent=1 // pred_region
      %203 = vsyncadd [#allocation3], 0
      %s205 = sshll.u32 [#allocation2], 4
      %s206 = int_to_ptr.vmem [resolvable:$true] %s205
      %s207 = sshll.u32 %s7, 4
      %s208 = int_to_ptr.hbm [resolvable:$true] %s207
      %210 = dma.vmem_to_hbm [thread:$0]  %s206, 32, %s208, [#allocation3]
    $region33: #{tpu_custom_call.1} parent=1 // pred_fallthru
      _
    // Predicated region
    $region34: #{tpu_custom_call.1} parent=1 // pred_check
      _
    $region35: #{tpu_custom_call.1} parent=1 // pred_check_branch
      %212 = sbr.rel (0) target = $region37
    $region36: #{tpu_custom_call.1} parent=1 // pred_region
      %214 = dma.done [#allocation3], 32
    $region37: #{tpu_custom_call.1} parent=1 // pred_fallthru
      _
    %215 = vsyncpa [#allocation3], 1

</llo_original>
